<compile_context>
chip_gen: v7x
topology: tpu7x:2x2x1
jax: 0.10.0
libtpu: 0.0.40
codegen_flags: <defaults>
</compile_context>

<pallas_src>
import functools

import jax
import jax.numpy as jnp
from jax.experimental import pallas as pl
from jax.experimental.pallas import tpu as pltpu

LANE = 128        # lane width (hidden dims padded to this inside VMEM only)
BM_ALIGN = 16     # batch-tile row granularity (safe for f32 and bf16 layouts)
BM_MAX = 8192     # max batch-tile rows (sized against v5e's 16 MiB scoped VMEM)


def _round_up(n, m):
    return ((n + m - 1) // m) * m


def _pad2d(a, rows, cols):
    return jnp.pad(a, ((0, rows - a.shape[0]), (0, cols - a.shape[1])))


def _leaky_relu(x, alpha):
    return jnp.where(x > 0, x, alpha * x)


def generator_kernel(x_ref, w1_ref, b1_ref, w2_ref, b2_ref, w3_ref, b3_ref,
                     o_ref, *, alpha, compute_dtype):
    # Layer 1: (bm, in_pad) x (in_pad, 128) -> f32 accumulate
    h = jnp.dot(x_ref[...], w1_ref[...],
                preferred_element_type=jnp.float32) + b1_ref[...]
    h = _leaky_relu(h, alpha)

    # Layer 2: (bm, 128) x (128, 128)
    h = jnp.dot(h.astype(compute_dtype), w2_ref[...],
                preferred_element_type=jnp.float32) + b2_ref[...]
    h = _leaky_relu(h, alpha)

    # Layer 3: (bm, 128) x (128, out_pad)
    h = jnp.dot(h.astype(compute_dtype), w3_ref[...],
                preferred_element_type=jnp.float32) + b3_ref[...]
    o_ref[...] = h.astype(o_ref.dtype)


def prepare_generator_params(params, *, use_bf16=False):
    """Pad & cast parameters once (outside the per-call path).

    Params come in (in, out) / (1, out) layout (transposed vs. torch).
    Hidden dims are padded to 128 (VMEM-resident only); the HBM-facing
    input/output dims are padded only to the next multiple of 8.
    Zero padding is numerically inert: padded rows/cols/biases are 0 and
    leaky_relu(0) = 0.
    """
    w1, b1, w2, b2, w3, b3 = params
    in_dim, h1 = w1.shape
    h2 = w2.shape[1]
    out_dim = w3.shape[1]
    cdt = jnp.bfloat16 if use_bf16 else jnp.float32

    in_pad = _round_up(max(in_dim, 8), 8)
    h1_pad = _round_up(h1, LANE)
    h2_pad = _round_up(h2, LANE)
    out_pad = _round_up(max(out_dim, 8), 8)

    padded = (
        _pad2d(w1.astype(cdt), in_pad, h1_pad),
        _pad2d(b1.astype(jnp.float32).reshape(1, -1), 1, h1_pad),
        _pad2d(w2.astype(cdt), h1_pad, h2_pad),
        _pad2d(b2.astype(jnp.float32).reshape(1, -1), 1, h2_pad),
        _pad2d(w3.astype(cdt), h2_pad, out_pad),
        _pad2d(b3.astype(jnp.float32).reshape(1, -1), 1, out_pad),
    )
    meta = dict(in_dim=in_dim, h1=h1, h2=h2, out_dim=out_dim,
                in_pad=in_pad, h1_pad=h1_pad, h2_pad=h2_pad, out_pad=out_pad,
                compute_dtype=cdt)
    return padded, meta


def generator_forward(x, prepared, *, alpha=0.2):
    """x: (batch, input_dim).  prepared: output of prepare_generator_params."""
    padded, meta = prepared
    w1p, b1p, w2p, b2p, w3p, b3p = padded
    batch, in_dim = x.shape
    assert in_dim == meta["in_dim"]
    in_pad, h1_pad = meta["in_pad"], meta["h1_pad"]
    h2_pad, out_pad = meta["h2_pad"], meta["out_pad"]
    out_dim = meta["out_dim"]
    cdt = meta["compute_dtype"]

    # ---- balanced batch tiling ---------------------------------------------
    n_tiles = int(pl.cdiv(batch, BM_MAX))
    if batch >= 2 * BM_ALIGN:
        # Give v7x's second TensorCore work; harmless elsewhere.
        n_tiles = max(n_tiles, 2)
    bm = _round_up(int(pl.cdiv(batch, n_tiles)), BM_ALIGN)
    batch_p = bm * n_tiles

    # Only the batch rows get padded here; the feature dim stays narrow (8).
    xp = _pad2d(x.astype(cdt), batch_p, in_pad)

    # ---- BlockSpecs ---------------------------------------------------------
    x_spec = pl.BlockSpec((bm, in_pad), lambda i: (i, 0))
    w1_spec = pl.BlockSpec((in_pad, h1_pad), lambda i: (0, 0))
    b1_spec = pl.BlockSpec((1, h1_pad), lambda i: (0, 0))
    w2_spec = pl.BlockSpec((h1_pad, h2_pad), lambda i: (0, 0))
    b2_spec = pl.BlockSpec((1, h2_pad), lambda i: (0, 0))
    w3_spec = pl.BlockSpec((h2_pad, out_pad), lambda i: (0, 0))
    b3_spec = pl.BlockSpec((1, out_pad), lambda i: (0, 0))
    out_spec = pl.BlockSpec((bm, out_pad), lambda i: (i, 0))

    # Advisory cost: useful flops, actual DMA'd bytes.
    flops = 2 * batch * (meta["in_dim"] * meta["h1"]
                         + meta["h1"] * meta["h2"]
                         + meta["h2"] * out_dim)
    bytes_accessed = int(
        xp.size * xp.dtype.itemsize
        + batch_p * out_pad * 4
        + sum(int(a.size) * a.dtype.itemsize
              for a in (w1p, b1p, w2p, b2p, w3p, b3p)))
    cost = pl.CostEstimate(flops=flops, transcendentals=0,
                           bytes_accessed=bytes_accessed)

    out_padded = pl.pallas_call(
        functools.partial(generator_kernel, alpha=alpha, compute_dtype=cdt),
        out_shape=jax.ShapeDtypeStruct((batch_p, out_pad), jnp.float32),
        grid=(n_tiles,),
        in_specs=[x_spec, w1_spec, b1_spec, w2_spec, b2_spec, w3_spec, b3_spec],
        out_specs=out_spec,
        compiler_params=pltpu.CompilerParams(
            dimension_semantics=("parallel",),
            vmem_limit_bytes=32 * 1024 * 1024),
        cost_estimate=cost,
    )(xp, w1p, b1p, w2p, b2p, w3p, b3p)

    return out_padded[:batch, :out_dim]


def init_generator_params(key, input_dim=5, output_dim=10):
    """Deterministic synthetic init matching the nn.Linear shapes.

    Dense1: input_dim -> 2*input_dim
    Dense2: 2*input_dim -> input_dim//2   (input_dim >= 2 branch)
    Dense3: input_dim//2 -> output_dim
    Weights stored transposed relative to torch: (in, out). Biases as (1, out).
    """
    h1 = input_dim * 2
    h2 = input_dim // 2 if input_dim >= 2 else input_dim

    keys = jax.random.split(key, 6)

    def uniform_init(k, fan_in, shape):
        bound = 1.0 / jnp.sqrt(float(fan_in))
        return jax.random.uniform(k, shape, jnp.float32, -bound, bound)

    w1 = uniform_init(keys[0], input_dim, (input_dim, h1))
    b1 = uniform_init(keys[1], input_dim, (1, h1))
    w2 = uniform_init(keys[2], h1, (h1, h2))
    b2 = uniform_init(keys[3], h1, (1, h2))
    w3 = uniform_init(keys[4], h2, (h2, output_dim))
    b3 = uniform_init(keys[5], h2, (1, output_dim))
    return (w1, b1, w2, b2, w3, b3)


def generator_reference(x, params, *, alpha=0.2):
    w1, b1, w2, b2, w3, b3 = params
    h = jax.nn.leaky_relu(x @ w1 + b1, negative_slope=alpha)
    h = jax.nn.leaky_relu(h @ w2 + b2, negative_slope=alpha)
    return h @ w3 + b3


if __name__ == "__main__":
    input_dim = 5
    output_dim = 10
    batch = 8
    alpha = 0.2

    key = jax.random.PRNGKey(0)
    k_x, k_p = jax.random.split(key)

    x = jax.random.normal(k_x, (batch, input_dim), dtype=jnp.float32)
    params = init_generator_params(k_p, input_dim=input_dim, output_dim=output_dim)

    # f32 path: params are padded/cast once, reused across calls.
    prepared = prepare_generator_params(params, use_bf16=False)

    out = generator_forward(x, prepared, alpha=alpha)
    out = jax.block_until_ready(out)
    ref = generator_reference(x, params, alpha=alpha)
    assert out.shape == (batch, output_dim)
    assert jnp.allclose(out, ref, atol=1e-5, rtol=1e-5), "mismatch vs reference"

    # Ragged batch (exercises balanced multi-tile path, last tile padded < 16 rows).
    x2 = jax.random.normal(jax.random.PRNGKey(1), (37, input_dim), dtype=jnp.float32)
    out2 = jax.block_until_ready(generator_forward(x2, prepared, alpha=alpha))
    ref2 = generator_reference(x2, params, alpha=alpha)
    assert out2.shape == (37, output_dim)
    assert jnp.allclose(out2, ref2, atol=1e-5, rtol=1e-5), "mismatch (ragged batch)"

    # Optional bf16-operand path (halved HBM traffic); relaxed tolerance.
    prepared_bf16 = prepare_generator_params(params, use_bf16=True)
    out3 = jax.block_until_ready(generator_forward(x2, prepared_bf16, alpha=alpha))
    assert out3.shape == (37, output_dim)
    assert jnp.allclose(out3, ref2, atol=2e-2, rtol=2e-2), "mismatch (bf16 path)"

    print("KERNEL_OK")
</pallas_src>

<mosaic_0001>
module attributes {stable_mosaic.version = 11 : i64} {
  func.func @generator_kernel(%arg0: i32, %arg1: memref<16x8xf32, #tpu.memory_space<vmem>>, %arg2: memref<8x128xf32, #tpu.memory_space<vmem>>, %arg3: memref<1x128xf32, #tpu.memory_space<vmem>>, %arg4: memref<128x128xf32, #tpu.memory_space<vmem>>, %arg5: memref<1x128xf32, #tpu.memory_space<vmem>>, %arg6: memref<128x16xf32, #tpu.memory_space<vmem>>, %arg7: memref<1x16xf32, #tpu.memory_space<vmem>>, %arg8: memref<16x16xf32, #tpu.memory_space<vmem>>) attributes {dimension_semantics = [#tpu.dimension_semantics<parallel>], iteration_bounds = array<i64: 1>, scalar_prefetch = 0 : i64, scratch_operands = 0 : i64, tpu.core_type = #tpu.core_type<tc>, window_params = [{transform_indices = @transform_0, window_bounds = array<i64: 16, 8>}, {pipeline_mode = #tpu.pipeline_mode<synchronous>, transform_indices = @transform_1, window_bounds = array<i64: 8, 128>}, {pipeline_mode = #tpu.pipeline_mode<synchronous>, transform_indices = @transform_2, window_bounds = array<i64: 1, 128>}, {pipeline_mode = #tpu.pipeline_mode<synchronous>, transform_indices = @transform_3, window_bounds = array<i64: 128, 128>}, {pipeline_mode = #tpu.pipeline_mode<synchronous>, transform_indices = @transform_4, window_bounds = array<i64: 1, 128>}, {pipeline_mode = #tpu.pipeline_mode<synchronous>, transform_indices = @transform_5, window_bounds = array<i64: 128, 16>}, {pipeline_mode = #tpu.pipeline_mode<synchronous>, transform_indices = @transform_6, window_bounds = array<i64: 1, 16>}, {transform_indices = @transform_7, window_bounds = array<i64: 16, 16>}]} {
    %c0 = arith.constant 0 : index
    %c0_0 = arith.constant 0 : index
    %0 = vector.load %arg1[%c0, %c0_0] : memref<16x8xf32, #tpu.memory_space<vmem>>, vector<16x8xf32>
    %c0_1 = arith.constant 0 : index
    %c0_2 = arith.constant 0 : index
    %1 = vector.load %arg2[%c0_1, %c0_2] : memref<8x128xf32, #tpu.memory_space<vmem>>, vector<8x128xf32>
    %cst = arith.constant dense<0.000000e+00> : vector<16x128xf32>
    %2 = tpu.matmul %0, %1, %cst {dimension_numbers = #tpu.dot_dimension_numbers<[1], [0], [0], [1], [0, 0, 1, 1], [], []>} : vector<16x8xf32>, vector<8x128xf32>, vector<16x128xf32> -> vector<16x128xf32>
    %c0_3 = arith.constant 0 : index
    %c0_4 = arith.constant 0 : index
    %3 = vector.load %arg3[%c0_3, %c0_4] : memref<1x128xf32, #tpu.memory_space<vmem>>, vector<1x128xf32>
    %4 = vector.broadcast %3 : vector<1x128xf32> to vector<16x128xf32>
    %5 = arith.addf %2, %4 : vector<16x128xf32>
    %cst_5 = arith.constant 0.000000e+00 : f32
    %6 = vector.broadcast %cst_5 : f32 to vector<16x128xf32>
    %7 = arith.cmpf ogt, %5, %6 : vector<16x128xf32>
    %cst_6 = arith.constant 2.000000e-01 : f32
    %8 = vector.broadcast %cst_6 : f32 to vector<16x128xf32>
    %9 = arith.mulf %8, %5 : vector<16x128xf32>
    %10 = arith.select %7, %5, %9 : vector<16x128xi1>, vector<16x128xf32>
    %c0_7 = arith.constant 0 : index
    %c0_8 = arith.constant 0 : index
    %11 = vector.load %arg4[%c0_7, %c0_8] : memref<128x128xf32, #tpu.memory_space<vmem>>, vector<128x128xf32>
    %cst_9 = arith.constant dense<0.000000e+00> : vector<16x128xf32>
    %12 = tpu.matmul %10, %11, %cst_9 {dimension_numbers = #tpu.dot_dimension_numbers<[1], [0], [0], [1], [0, 0, 1, 1], [], []>} : vector<16x128xf32>, vector<128x128xf32>, vector<16x128xf32> -> vector<16x128xf32>
    %c0_10 = arith.constant 0 : index
    %c0_11 = arith.constant 0 : index
    %13 = vector.load %arg5[%c0_10, %c0_11] : memref<1x128xf32, #tpu.memory_space<vmem>>, vector<1x128xf32>
    %14 = vector.broadcast %13 : vector<1x128xf32> to vector<16x128xf32>
    %15 = arith.addf %12, %14 : vector<16x128xf32>
    %cst_12 = arith.constant 0.000000e+00 : f32
    %16 = vector.broadcast %cst_12 : f32 to vector<16x128xf32>
    %17 = arith.cmpf ogt, %15, %16 : vector<16x128xf32>
    %cst_13 = arith.constant 2.000000e-01 : f32
    %18 = vector.broadcast %cst_13 : f32 to vector<16x128xf32>
    %19 = arith.mulf %18, %15 : vector<16x128xf32>
    %20 = arith.select %17, %15, %19 : vector<16x128xi1>, vector<16x128xf32>
    %c0_14 = arith.constant 0 : index
    %c0_15 = arith.constant 0 : index
    %21 = vector.load %arg6[%c0_14, %c0_15] : memref<128x16xf32, #tpu.memory_space<vmem>>, vector<128x16xf32>
    %cst_16 = arith.constant dense<0.000000e+00> : vector<16x16xf32>
    %22 = tpu.matmul %20, %21, %cst_16 {dimension_numbers = #tpu.dot_dimension_numbers<[1], [0], [0], [1], [0, 0, 1, 1], [], []>} : vector<16x128xf32>, vector<128x16xf32>, vector<16x16xf32> -> vector<16x16xf32>
    %c0_17 = arith.constant 0 : index
    %c0_18 = arith.constant 0 : index
    %23 = vector.load %arg7[%c0_17, %c0_18] : memref<1x16xf32, #tpu.memory_space<vmem>>, vector<1x16xf32>
    %24 = vector.broadcast %23 : vector<1x16xf32> to vector<16x16xf32>
    %25 = arith.addf %22, %24 : vector<16x16xf32>
    %c0_19 = arith.constant 0 : index
    %c0_20 = arith.constant 0 : index
    %26 = vector.load %arg8[%c0_19, %c0_20] : memref<16x16xf32, #tpu.memory_space<vmem>>, vector<16x16xf32>
    tpu.vector_store %arg8[%c0_19, %c0_20], %25 {strides = array<i32>} : memref<16x16xf32, #tpu.memory_space<vmem>>, vector<16x16xf32>,
    return
  }
  func.func @transform_0(%arg0: i32) -> (i32, i32) {
    %c0_i32 = arith.constant 0 : i32
    %c0_i32_0 = arith.constant 0 : i32
    return %arg0, %c0_i32 : i32, i32
  }
  func.func @transform_1(%arg0: i32) -> (i32, i32) {
    %c0_i32 = arith.constant 0 : i32
    %c0_i32_0 = arith.constant 0 : i32
    %c0_i32_1 = arith.constant 0 : i32
    return %c0_i32, %c0_i32_0 : i32, i32
  }
  func.func @transform_2(%arg0: i32) -> (i32, i32) {
    %c0_i32 = arith.constant 0 : i32
    %c0_i32_0 = arith.constant 0 : i32
    %c0_i32_1 = arith.constant 0 : i32
    return %c0_i32, %c0_i32_0 : i32, i32
  }
  func.func @transform_3(%arg0: i32) -> (i32, i32) {
    %c0_i32 = arith.constant 0 : i32
    %c0_i32_0 = arith.constant 0 : i32
    %c0_i32_1 = arith.constant 0 : i32
    return %c0_i32, %c0_i32_0 : i32, i32
  }
  func.func @transform_4(%arg0: i32) -> (i32, i32) {
    %c0_i32 = arith.constant 0 : i32
    %c0_i32_0 = arith.constant 0 : i32
    %c0_i32_1 = arith.constant 0 : i32
    return %c0_i32, %c0_i32_0 : i32, i32
  }
  func.func @transform_5(%arg0: i32) -> (i32, i32) {
    %c0_i32 = arith.constant 0 : i32
    %c0_i32_0 = arith.constant 0 : i32
    %c0_i32_1 = arith.constant 0 : i32
    return %c0_i32, %c0_i32_0 : i32, i32
  }
  func.func @transform_6(%arg0: i32) -> (i32, i32) {
    %c0_i32 = arith.constant 0 : i32
    %c0_i32_0 = arith.constant 0 : i32
    %c0_i32_1 = arith.constant 0 : i32
    return %c0_i32, %c0_i32_0 : i32, i32
  }
  func.func @transform_7(%arg0: i32) -> (i32, i32) {
    %c0_i32 = arith.constant 0 : i32
    %c0_i32_0 = arith.constant 0 : i32
    return %arg0, %c0_i32 : i32, i32
  }
}

</mosaic_0001>

<llo_original>
// kernel: tpu_custom_call.1
$region0: #{tpu_custom_call.1}
  #allocation0 [shape = 'u32[]', space=smem, size = 0x4, offset = 0x4, fixed_abs, tag = 'smem constant byte address 0x4 - core index']
  #allocation1 [shape = 'u32[144,128]{1,0:T(1,128)}', space=vmem, size = 0x12000, scoped, tag = 'internal scratch']
  %s0 = inlined_call_operand.vmem [shape: f32[16,8], index: 0, kind: input, shape index: {}]
  %s1 = inlined_call_operand.vmem [shape: f32[8,128], index: 1, kind: input, shape index: {}]
  %s2 = inlined_call_operand.vmem [shape: f32[1,128], index: 2, kind: input, shape index: {}]
  %s3 = inlined_call_operand.vmem [shape: f32[128,128], index: 3, kind: input, shape index: {}]
  %s4 = inlined_call_operand.vmem [shape: f32[1,128], index: 4, kind: input, shape index: {}]
  %s5 = inlined_call_operand.vmem [shape: f32[128,16], index: 5, kind: input, shape index: {}]
  %s6 = inlined_call_operand.vmem [shape: f32[1,16], index: 6, kind: input, shape index: {}]
  %s7 = inlined_call_operand.hbm [shape: f32[16,16], index: 7, kind: output, shape index: {}]
  %s8 = sld [smem:[#allocation0]]
  $region38: #{tpu_custom_call.1} parent=0
    _
  %s10 = ssub.s32 1, %s8
  %s11 = scalar_select 0, %s10, %s8
  $region1: #{tpu_custom_call.1} parent=0
    #allocation2 [shape = 'u8[8192]{0}', space=vmem, size = 0x2000, scoped, tag = 'output window, operand 0, single buffered']
    #allocation3 [shape = 's32[1]{0}', space=sflag, size = 0x4, scoped, tag = 'scoped memory for tpu_custom_call.1']
    %12 = vsyncpa [#allocation3], 0
    // Predicated region
    $region2: #{tpu_custom_call.1} parent=1 // pred_check
      _
    $region3: #{tpu_custom_call.1} parent=1 // pred_check_branch
      %14 = sbr.rel (0) target = $region5
    $region4: #{tpu_custom_call.1} parent=1 // pred_region
      _
    $region5: #{tpu_custom_call.1} parent=1 // pred_fallthru
      _
    // Predicated region
    $region6: #{tpu_custom_call.1} parent=1 // pred_check
      _
    $region7: #{tpu_custom_call.1} parent=1 // pred_check_branch
      %16 = sbr.rel (0) target = $region9
    $region8: #{tpu_custom_call.1} parent=1 // pred_region
      _
    $region9: #{tpu_custom_call.1} parent=1 // pred_fallthru
      _
    // Predicated region
    $region10: #{tpu_custom_call.1} parent=1 // pred_check
      _
    $region11: #{tpu_custom_call.1} parent=1 // pred_check_branch
      %18 = sbr.rel (0) target = $region13
    $region12: #{tpu_custom_call.1} parent=1 // pred_region
      _
    $region13: #{tpu_custom_call.1} parent=1 // pred_fallthru
      _
    // Predicated region
    $region14: #{tpu_custom_call.1} parent=1 // pred_check
      _
    $region15: #{tpu_custom_call.1} parent=1 // pred_check_branch
      %20 = sbr.rel (0) target = $region17
    $region16: #{tpu_custom_call.1} parent=1 // pred_region
      _
    $region17: #{tpu_custom_call.1} parent=1 // pred_fallthru
      _
    // Predicated region
    $region18: #{tpu_custom_call.1} parent=1 // pred_check
      _
    $region19: #{tpu_custom_call.1} parent=1 // pred_check_branch
      %22 = sbr.rel (0) target = $region21
    $region20: #{tpu_custom_call.1} parent=1 // pred_region
      _
    $region21: #{tpu_custom_call.1} parent=1 // pred_fallthru
      _
    // Predicated region
    $region22: #{tpu_custom_call.1} parent=1 // pred_check
      _
    $region23: #{tpu_custom_call.1} parent=1 // pred_check_branch
      %24 = sbr.rel (0) target = $region25
    $region24: #{tpu_custom_call.1} parent=1 // pred_region
      _
    $region25: #{tpu_custom_call.1} parent=1 // pred_fallthru
      _
    // Predicated region
    $region26: #{tpu_custom_call.1} parent=1 // pred_check
      _
    $region27: #{tpu_custom_call.1} parent=1 // pred_check_branch
      %26 = sbr.rel (0) target = $region29
    $region28: #{tpu_custom_call.1} parent=1 // pred_region
      _
    $region29: #{tpu_custom_call.1} parent=1 // pred_fallthru
      _
    %v27 = vld [vmem:[%s0] sm:$0xff]
    %v28 = vld [vmem:[%s0 + $0x8] sm:$0xff]
    %v29 = vld [vmem:[%s1] sm:$0xff]
    %v30 = vld [vmem:[%s2] sm:$0x1]
    %v32 = vlaneseq
    %v33 = vshrl.u32 %v32, 7
    %v34 = vsub.s32 0, %v33
    %v35 = vrot.slane %v30, %v34
    %vm37 = vcmask 64512
    %v39 = vsel %vm37, %v27, 0
    %v42 = vsel %vm37, %v28, 0
    %44 = vmatprep.subr.mxu0 0.0
    %45 = vmatpush1.msra.mxu0 %v29
    %46 = vmatprep.subr.mxu0 0.0
    %47 = vmatpush1.msra.mxu0 0.0
    %48 = vmatprep.subr.mxu0 0.0
    %49 = vmatpush1.msra.mxu0 0.0
    %50 = vmatprep.subr.mxu0 0.0
    %51 = vmatpush1.msra.mxu0 0.0
    %52 = vmatprep.subr.mxu0 0.0
    %53 = vmatpush1.msra.mxu0 0.0
    %54 = vmatprep.subr.mxu0 0.0
    %55 = vmatpush1.msra.mxu0 0.0
    %56 = vmatprep.subr.mxu0 0.0
    %57 = vmatpush1.msra.mxu0 0.0
    %58 = vmatprep.subr.mxu0 0.0
    %59 = vmatpush1.msra.mxu0 0.0
    %60 = vmatprep.subr.mxu0 0.0
    %61 = vmatpush1.msra.mxu0 0.0
    %62 = vmatprep.subr.mxu0 0.0
    %63 = vmatpush1.msra.mxu0 0.0
    %64 = vmatprep.subr.mxu0 0.0
    %65 = vmatpush1.msra.mxu0 0.0
    %66 = vmatprep.subr.mxu0 0.0
    %67 = vmatpush1.msra.mxu0 0.0
    %68 = vmatprep.subr.mxu0 0.0
    %69 = vmatpush1.msra.mxu0 0.0
    %70 = vmatprep.subr.mxu0 0.0
    %71 = vmatpush1.msra.mxu0 0.0
    %72 = vmatprep.subr.mxu0 0.0
    %73 = vmatpush1.msra.mxu0 0.0
    %74 = vmatprep.subr.mxu0 0.0
    %75 = vmatpush1.msra.mxu0 0.0
    %76 = vmatprep.subr.mxu0 0.0
    %77 = vmatpush1.msra.mxu0 0.0
    %78 = vmatprep.subr.mxu0 0.0
    %79 = vmatpush1.msra.mxu0 0.0
    %80 = vmatprep.subr.mxu0 0.0
    %81 = vmatpush1.msra.mxu0 0.0
    %82 = vmatprep.subr.mxu0 0.0
    %83 = vmatpush1.msra.mxu0 0.0
    %84 = vmatprep.subr.mxu0 0.0
    %85 = vmatpush1.msra.mxu0 0.0
    %86 = vmatprep.subr.mxu0 0.0
    %87 = vmatpush1.msra.mxu0 0.0
    %88 = vmatprep.subr.mxu0 0.0
    %89 = vmatpush1.msra.mxu0 0.0
    %90 = vmatprep.subr.mxu0 0.0
    %91 = vmatpush1.msra.mxu0 0.0
    %92 = vmatprep.subr.mxu0 0.0
    %93 = vmatpush1.msra.mxu0 0.0
    %94 = vmatprep.subr.mxu0 0.0
    %95 = vmatpush1.msra.mxu0 0.0
    %96 = vmatprep.subr.mxu0 0.0
    %97 = vmatpush1.msra.mxu0 0.0
    %98 = vmatprep.subr.mxu0 0.0
    %99 = vmatpush1.msra.mxu0 0.0
    %100 = vmatprep.subr.mxu0 0.0
    %101 = vmatpush1.msra.mxu0 0.0
    %102 = vmatprep.subr.mxu0 0.0
    %103 = vmatpush1.msra.mxu0 0.0
    %104 = vmatprep.subr.mxu0 0.0
    %105 = vmatpush1.msra.mxu0 0.0
    %106 = vmatprep.subr.mxu0 0.0
    %107 = vmatpush1.msra.mxu0 0.0
    %108 = vmatprep.mubr.f32.mxu0 0.0
    %109 = vmatmul.mubr.f32.gmra.mrb[0].mxu0 %v39
    %v110 = vpop.f32.mrb[0].mxu0
    %v111 = vadd.f32 %v35, %v110
    %v112 = vpop.f32.mrb[0].mxu0
    %113 = vmatprep.mubr.f32.mxu0 0.0
    %114 = vmatmul.mubr.f32.gmra.mrb[0].mxu0 %v42
    %v115 = vpop.f32.mrb[0].mxu0
    %v116 = vadd.f32 %v35, %v115
    %v117 = vpop.f32.mrb[0].mxu0
    %118 = vdwg.mxu0
    %vm119 = vcmp.gt.f32.partialorder %v111, 0.0
    %vm120 = vcmp.gt.f32.partialorder %v116, 0.0
    %v121 = vmul.f32 %v111, 0.2
    %v122 = vmul.f32 %v116, 0.2
    %v123 = vsel %vm119, %v111, %v121
    %v124 = vsel %vm120, %v116, %v122
    %v125 = vld [vmem:[%s3] sm:$0xff]
    %v126 = vld [vmem:[%s3 + $0x8] sm:$0xff]
    %v127 = vld [vmem:[%s3 + $0x10] sm:$0xff]
    %v128 = vld [vmem:[%s3 + $0x18] sm:$0xff]
    %v129 = vld [vmem:[%s3 + $0x20] sm:$0xff]
    %v130 = vld [vmem:[%s3 + $0x28] sm:$0xff]
    %v131 = vld [vmem:[%s3 + $0x30] sm:$0xff]
    %v132 = vld [vmem:[%s3 + $0x38] sm:$0xff]
    %v133 = vld [vmem:[%s3 + $0x40] sm:$0xff]
    %v134 = vld [vmem:[%s3 + $0x48] sm:$0xff]
    %v135 = vld [vmem:[%s3 + $0x50] sm:$0xff]
    %v136 = vld [vmem:[%s3 + $0x58] sm:$0xff]
    %v137 = vld [vmem:[%s3 + $0x60] sm:$0xff]
    %v138 = vld [vmem:[%s3 + $0x68] sm:$0xff]
    %v139 = vld [vmem:[%s3 + $0x70] sm:$0xff]
    %v140 = vld [vmem:[%s3 + $0x78] sm:$0xff]
    %v141 = vld [vmem:[%s4] sm:$0x1]
    %v143 = vlaneseq
    %v144 = vshrl.u32 %v143, 7
    %v145 = vsub.s32 0, %v144
    %v146 = vrot.slane %v141, %v145
    %148 = vmatprep.subr.mxu0 0.0
    %149 = vmatpush1.msra.mxu0 %v125
    %150 = vmatprep.subr.mxu0 0.0
    %151 = vmatpush1.msra.mxu0 %v126
    %152 = vmatprep.subr.mxu0 0.0
    %153 = vmatpush1.msra.mxu0 %v127
    %154 = vmatprep.subr.mxu0 0.0
    %155 = vmatpush1.msra.mxu0 %v128
    %156 = vmatprep.subr.mxu0 0.0
    %157 = vmatpush1.msra.mxu0 %v129
    %158 = vmatprep.subr.mxu0 0.0
    %159 = vmatpush1.msra.mxu0 %v130
    %160 = vmatprep.subr.mxu0 0.0
    %161 = vmatpush1.msra.mxu0 %v131
    %162 = vmatprep.subr.mxu0 0.0
    %163 = vmatpush1.msra.mxu0 %v132
    %164 = vmatprep.subr.mxu0 0.0
    %165 = vmatpush1.msra.mxu0 %v133
    %166 = vmatprep.subr.mxu0 0.0
    %167 = vmatpush1.msra.mxu0 %v134
    %168 = vmatprep.subr.mxu0 0.0
    %169 = vmatpush1.msra.mxu0 %v135
    %170 = vmatprep.subr.mxu0 0.0
    %171 = vmatpush1.msra.mxu0 %v136
    %172 = vmatprep.subr.mxu0 0.0
    %173 = vmatpush1.msra.mxu0 %v137
    %174 = vmatprep.subr.mxu0 0.0
    %175 = vmatpush1.msra.mxu0 %v138
    %176 = vmatprep.subr.mxu0 0.0
    %177 = vmatpush1.msra.mxu0 %v139
    %178 = vmatprep.subr.mxu0 0.0
    %179 = vmatpush1.msra.mxu0 %v140
    %180 = vmatprep.subr.mxu0 0.0
    %181 = vmatpush1.msra.mxu0 0.0
    %182 = vmatprep.subr.mxu0 0.0
    %183 = vmatpush1.msra.mxu0 0.0
    %184 = vmatprep.subr.mxu0 0.0
    %185 = vmatpush1.msra.mxu0 0.0
    %186 = vmatprep.subr.mxu0 0.0
    %187 = vmatpush1.msra.mxu0 0.0
    %188 = vmatprep.subr.mxu0 0.0
    %189 = vmatpush1.msra.mxu0 0.0
    %190 = vmatprep.subr.mxu0 0.0
    %191 = vmatpush1.msra.mxu0 0.0
    %192 = vmatprep.subr.mxu0 0.0
    %193 = vmatpush1.msra.mxu0 0.0
    %194 = vmatprep.subr.mxu0 0.0
    %195 = vmatpush1.msra.mxu0 0.0
    %196 = vmatprep.subr.mxu0 0.0
    %197 = vmatpush1.msra.mxu0 0.0
    %198 = vmatprep.subr.mxu0 0.0
    %199 = vmatpush1.msra.mxu0 0.0
    %200 = vmatprep.subr.mxu0 0.0
    %201 = vmatpush1.msra.mxu0 0.0
    %202 = vmatprep.subr.mxu0 0.0
    %203 = vmatpush1.msra.mxu0 0.0
    %204 = vmatprep.subr.mxu0 0.0
    %205 = vmatpush1.msra.mxu0 0.0
    %206 = vmatprep.subr.mxu0 0.0
    %207 = vmatpush1.msra.mxu0 0.0
    %208 = vmatprep.subr.mxu0 0.0
    %209 = vmatpush1.msra.mxu0 0.0
    %210 = vmatprep.subr.mxu0 0.0
    %211 = vmatpush1.msra.mxu0 0.0
    %212 = vmatprep.mubr.f32.mxu0 0.0
    %213 = vmatmul.mubr.f32.gmra.mrb[0].mxu0 %v123
    %v214 = vpop.f32.mrb[0].mxu0
    %v215 = vadd.f32 %v146, %v214
    %v216 = vpop.f32.mrb[0].mxu0
    %217 = vmatprep.mubr.f32.mxu0 0.0
    %218 = vmatmul.mubr.f32.gmra.mrb[0].mxu0 %v124
    %v219 = vpop.f32.mrb[0].mxu0
    %v220 = vadd.f32 %v146, %v219
    %v221 = vpop.f32.mrb[0].mxu0
    %222 = vdwg.mxu0
    %vm223 = vcmp.gt.f32.partialorder %v215, 0.0
    %vm224 = vcmp.gt.f32.partialorder %v220, 0.0
    %v225 = vmul.f32 %v215, 0.2
    %v226 = vmul.f32 %v220, 0.2
    %v227 = vsel %vm223, %v215, %v225
    %v228 = vsel %vm224, %v220, %v226
    %v229 = vld [vmem:[%s5] sm:$0xff]
    %v230 = vld [vmem:[%s5 + $0x8] sm:$0xff]
    %v231 = vld [vmem:[%s5 + $0x10] sm:$0xff]
    %v232 = vld [vmem:[%s5 + $0x18] sm:$0xff]
    %v233 = vld [vmem:[%s5 + $0x20] sm:$0xff]
    %v234 = vld [vmem:[%s5 + $0x28] sm:$0xff]
    %v235 = vld [vmem:[%s5 + $0x30] sm:$0xff]
    %v236 = vld [vmem:[%s5 + $0x38] sm:$0xff]
    %v237 = vld [vmem:[%s5 + $0x40] sm:$0xff]
    %v238 = vld [vmem:[%s5 + $0x48] sm:$0xff]
    %v239 = vld [vmem:[%s5 + $0x50] sm:$0xff]
    %v240 = vld [vmem:[%s5 + $0x58] sm:$0xff]
    %v241 = vld [vmem:[%s5 + $0x60] sm:$0xff]
    %v242 = vld [vmem:[%s5 + $0x68] sm:$0xff]
    %v243 = vld [vmem:[%s5 + $0x70] sm:$0xff]
    %v244 = vld [vmem:[%s5 + $0x78] sm:$0xff]
    %v245 = vld [vmem:[%s6] sm:$0x1]
    %v247 = vlaneseq
    %v248 = vshrl.u32 %v247, 7
    %v249 = vsub.s32 0, %v248
    %v250 = vrot.slane %v245, %v249
    %252 = vmatprep.subr.mxu0 0.0
    %253 = vmatpush1.msra.mxu0 %v229
    %254 = vmatprep.subr.mxu0 0.0
    %255 = vmatpush1.msra.mxu0 %v230
    %256 = vmatprep.subr.mxu0 0.0
    %257 = vmatpush1.msra.mxu0 %v231
    %258 = vmatprep.subr.mxu0 0.0
    %259 = vmatpush1.msra.mxu0 %v232
    %260 = vmatprep.subr.mxu0 0.0
    %261 = vmatpush1.msra.mxu0 %v233
    %262 = vmatprep.subr.mxu0 0.0
    %263 = vmatpush1.msra.mxu0 %v234
    %264 = vmatprep.subr.mxu0 0.0
    %265 = vmatpush1.msra.mxu0 %v235
    %266 = vmatprep.subr.mxu0 0.0
    %267 = vmatpush1.msra.mxu0 %v236
    %268 = vmatprep.subr.mxu0 0.0
    %269 = vmatpush1.msra.mxu0 %v237
    %270 = vmatprep.subr.mxu0 0.0
    %271 = vmatpush1.msra.mxu0 %v238
    %272 = vmatprep.subr.mxu0 0.0
    %273 = vmatpush1.msra.mxu0 %v239
    %274 = vmatprep.subr.mxu0 0.0
    %275 = vmatpush1.msra.mxu0 %v240
    %276 = vmatprep.subr.mxu0 0.0
    %277 = vmatpush1.msra.mxu0 %v241
    %278 = vmatprep.subr.mxu0 0.0
    %279 = vmatpush1.msra.mxu0 %v242
    %280 = vmatprep.subr.mxu0 0.0
    %281 = vmatpush1.msra.mxu0 %v243
    %282 = vmatprep.subr.mxu0 0.0
    %283 = vmatpush1.msra.mxu0 %v244
    %284 = vmatprep.subr.mxu0 0.0
    %285 = vmatpush1.msra.mxu0 0.0
    %286 = vmatprep.subr.mxu0 0.0
    %287 = vmatpush1.msra.mxu0 0.0
    %288 = vmatprep.subr.mxu0 0.0
    %289 = vmatpush1.msra.mxu0 0.0
    %290 = vmatprep.subr.mxu0 0.0
    %291 = vmatpush1.msra.mxu0 0.0
    %292 = vmatprep.subr.mxu0 0.0
    %293 = vmatpush1.msra.mxu0 0.0
    %294 = vmatprep.subr.mxu0 0.0
    %295 = vmatpush1.msra.mxu0 0.0
    %296 = vmatprep.subr.mxu0 0.0
    %297 = vmatpush1.msra.mxu0 0.0
    %298 = vmatprep.subr.mxu0 0.0
    %299 = vmatpush1.msra.mxu0 0.0
    %300 = vmatprep.subr.mxu0 0.0
    %301 = vmatpush1.msra.mxu0 0.0
    %302 = vmatprep.subr.mxu0 0.0
    %303 = vmatpush1.msra.mxu0 0.0
    %304 = vmatprep.subr.mxu0 0.0
    %305 = vmatpush1.msra.mxu0 0.0
    %306 = vmatprep.subr.mxu0 0.0
    %307 = vmatpush1.msra.mxu0 0.0
    %308 = vmatprep.subr.mxu0 0.0
    %309 = vmatpush1.msra.mxu0 0.0
    %310 = vmatprep.subr.mxu0 0.0
    %311 = vmatpush1.msra.mxu0 0.0
    %312 = vmatprep.subr.mxu0 0.0
    %313 = vmatpush1.msra.mxu0 0.0
    %314 = vmatprep.subr.mxu0 0.0
    %315 = vmatpush1.msra.mxu0 0.0
    %316 = vmatprep.mubr.f32.mxu0 0.0
    %317 = vmatmul.mubr.f32.gmra.mrb[0].mxu0 %v227
    %v318 = vpop.f32.mrb[0].mxu0
    %v319 = vadd.f32 %v250, %v318
    %v320 = vpop.f32.mrb[0].mxu0
    %321 = vmatprep.mubr.f32.mxu0 0.0
    %322 = vmatmul.mubr.f32.gmra.mrb[0].mxu0 %v228
    %v323 = vpop.f32.mrb[0].mxu0
    %v324 = vadd.f32 %v250, %v323
    %v325 = vpop.f32.mrb[0].mxu0
    %326 = vdwg.mxu0
    %vm327 = vcmask 130048
    %328 = vst.msk [vmem:[#allocation2] sm:$0xff] %vm327, %v319
    %329 = vst.msk [vmem:[#allocation2 + $0x8] sm:$0xff] %vm327, %v324
    // Predicated region
    $region30: #{tpu_custom_call.1} parent=1 // pred_check
      _
    $region31: #{tpu_custom_call.1} parent=1 // pred_check_branch
      %331 = sbr.rel (0) target = $region33
    $region32: #{tpu_custom_call.1} parent=1 // pred_region
      %s333 = ssub.s32 256, 256
      %334 = vsyncadd [#allocation3], %s333
      %s335 = sshll.u32 [#allocation2], 4
      %s336 = int_to_ptr.vmem [resolvable:$true] %s335
      %341 = dma.vmem_to_hbm [thread:$0]  %s336, 256, %s7, [#allocation3], 128, 128, 8
    $region33: #{tpu_custom_call.1} parent=1 // pred_fallthru
      _
    // Predicated region
    $region34: #{tpu_custom_call.1} parent=1 // pred_check
      _
    $region35: #{tpu_custom_call.1} parent=1 // pred_check_branch
      %343 = sbr.rel (0) target = $region37
    $region36: #{tpu_custom_call.1} parent=1 // pred_region
      %344 = dma.done [#allocation3], 256
    $region37: #{tpu_custom_call.1} parent=1 // pred_fallthru
      _
    %345 = vsyncpa [#allocation3], 1

</llo_original>
